<compile_context>
chip_gen: v7x
topology: tpu7x:2x2x1
jax: 0.10.0
libtpu: 0.0.40
codegen_flags: <defaults>
</compile_context>

<pallas_src>
import jax
import jax.numpy as jnp
from jax.experimental import pallas as pl
from jax.experimental.pallas import tpu as pltpu


def _round_up(n, m):
    return ((n + m - 1) // m) * m


def _classifier_kernel(x_ref, wb_ref, bb_ref, wc_ref, bc_ref, out_ref, acc_ref):
    # x_ref:  (TB, C, THW)  current batch-tile / spatial-chunk of the NCHW input
    # wb_ref: (C, Hp)       base projection weight (mean scale folded in, zero-padded)
    # bb_ref: (1, Hp)       base projection bias (zero-padded)
    # wc_ref: (Hp, Kp)      classifier weight (zero-padded rows/cols)
    # bc_ref: (1, Kp)       classifier bias (zero-padded)
    # out_ref:(TB, Kp)      lane-dense logits block
    # acc_ref:(TB, C) f32   running spatial sum (VMEM scratch, persists over hw axis)
    hw = pl.program_id(1)

    @pl.when(hw == 0)
    def _():
        acc_ref[...] = jnp.zeros_like(acc_ref)

    # Stream the spatial reduction: partial lane-sum of this chunk, widened to f32
    # inside the reduce (no materialized full-tile cast).
    acc_ref[...] += jnp.sum(x_ref[...], axis=-1, dtype=jnp.float32)

    @pl.when(hw == pl.num_programs(1) - 1)
    def _():
        # The 1/(H*W) of the global average pool is already folded into wb.
        pooled = acc_ref[...]                                           # (TB, C)
        feat = jnp.dot(pooled, wb_ref[...],
                       preferred_element_type=jnp.float32)              # (TB, Hp)
        feat = jnp.maximum(feat + bb_ref[...], 0.0)                     # ReLU
        # Dropout is identity at inference; classifier Linear:
        logits = jnp.dot(feat, wc_ref[...],
                         preferred_element_type=jnp.float32)            # (TB, Kp)
        out_ref[...] = (logits + bc_ref[...]).astype(out_ref.dtype)


def _pick_tiles(B, C, HW, itemsize, *, spatial_tile=None, batch_tile=None,
                x_block_budget=6 * 1024 * 1024):
    """Pick (batch_tile, spatial_tile) so one x block fits the VMEM budget."""
    # --- spatial chunk (lane axis): multiple of 128 dividing HW, else the full
    #     extent (always legal since it equals the array dim).  Shrink when C is
    #     large so a single (1, C, thw) block stays within the budget.
    if spatial_tile is not None:
        thw = int(spatial_tile)
    elif HW % 128 == 0:
        cap = (x_block_budget // max(1, C * itemsize)) // 128 * 128
        thw = min(HW, 2048, max(128, cap))
        thw -= thw % 128
        thw = max(thw, 128)
        while HW % thw:
            thw -= 128
    else:
        thw = HW
    assert HW % thw == 0, "spatial tile must divide H*W"

    # --- batch tile (leading axis of the 3-D x block).
    row_bytes = C * thw * itemsize
    if batch_tile is not None:
        tb = min(int(batch_tile), B)
    else:
        tb = max(1, x_block_budget // max(1, row_bytes))
        tb = min(tb, B, 512)
        if tb < B:
            # Partial batch tiles: keep the (tb, Kp) output / (tb, C) scratch blocks
            # sublane-aligned.
            tb = min(B, max(8, (tb // 8) * 8))
    return tb, thw


def multilabel_classifier_forward(x_nchw, w_base, b_base, w_clf, b_clf,
                                  *, spatial_tile=None, batch_tile=None):
    """x_nchw: (B, C, H, W). Returns logits (B, num_classes) — inference mode."""
    B, C, H, W = x_nchw.shape
    HW = H * W
    hidden = w_base.shape[1]
    num_classes = w_clf.shape[1]

    # Lane-dense padding of the small N dimensions (avoids masked vst / wasted MXU
    # columns). Padded lanes are zero everywhere so they never leak into real logits.
    h_pad = _round_up(hidden, 128)
    k_pad = _round_up(num_classes, 128)

    # Fold the global-average-pool 1/(H*W) into the tiny base weight at trace time.
    wb = jnp.pad(w_base.astype(jnp.float32) * (1.0 / float(HW)),
                 ((0, 0), (0, h_pad - hidden)))
    bb = jnp.pad(b_base.astype(jnp.float32).reshape(1, hidden),
                 ((0, 0), (0, h_pad - hidden)))
    wc = jnp.pad(w_clf.astype(jnp.float32),
                 ((0, h_pad - hidden), (0, k_pad - num_classes)))
    bc = jnp.pad(b_clf.astype(jnp.float32).reshape(1, num_classes),
                 ((0, 0), (0, k_pad - num_classes)))

    x_flat = x_nchw.reshape(B, C, HW)
    tb, thw = _pick_tiles(B, C, HW, x_flat.dtype.itemsize,
                          spatial_tile=spatial_tile, batch_tile=batch_tile)
    grid = (pl.cdiv(B, tb), HW // thw)

    # Scoped-VMEM limit: 2x double-buffered x blocks + resident weights + out +
    # scratch + slack, never below the 32 MiB default, never above v7x's 64 MiB/TC.
    x_block_bytes = tb * C * thw * x_flat.dtype.itemsize
    weight_bytes = (wb.size + bb.size + wc.size + bc.size) * 4
    needed = 2 * x_block_bytes + weight_bytes + 2 * tb * k_pad * 4 + tb * C * 4
    vmem_limit = min(64 * 1024 * 1024, max(32 * 1024 * 1024, needed + (2 << 20)))

    cost = pl.CostEstimate(
        flops=B * C * HW + 2 * B * C * h_pad + 2 * B * h_pad * k_pad,
        transcendentals=0,
        bytes_accessed=(x_flat.size * x_flat.dtype.itemsize
                        + weight_bytes
                        + B * k_pad * 4),
    )

    logits_pad = pl.pallas_call(
        _classifier_kernel,
        out_shape=jax.ShapeDtypeStruct((B, k_pad), jnp.float32),
        grid=grid,
        in_specs=[
            # x streams per (batch-tile, HW-chunk) -> double-buffered by BlockSpec.
            pl.BlockSpec((tb, C, thw), lambda b, s: (b, 0, s)),
            # Weights / biases: constant index_map -> fetched once, stay resident.
            pl.BlockSpec((C, h_pad), lambda b, s: (0, 0)),
            pl.BlockSpec((1, h_pad), lambda b, s: (0, 0)),
            pl.BlockSpec((h_pad, k_pad), lambda b, s: (0, 0)),
            pl.BlockSpec((1, k_pad), lambda b, s: (0, 0)),
        ],
        out_specs=pl.BlockSpec((tb, k_pad), lambda b, s: (b, 0)),
        scratch_shapes=[pltpu.VMEM((tb, C), jnp.float32)],
        compiler_params=pltpu.CompilerParams(
            dimension_semantics=("parallel", "arbitrary"),
            vmem_limit_bytes=int(vmem_limit),
        ),
        cost_estimate=cost,
    )(x_flat, wb, bb, wc, bc)

    # Slice the zero-padded lanes back off.
    return logits_pad[:, :num_classes]


if __name__ == "__main__":
    # Small shapes consistent with the module's forward:
    #   x: (batch=2, channels=4, 16, 16), base_model.output_dim (hidden) = 32,
    #   num_classes = 8, dropout_prob irrelevant at inference (identity).
    B, C, H, W = 2, 4, 16, 16
    hidden, num_classes = 32, 8

    key = jax.random.PRNGKey(0)
    k_x, k_wb, k_bb, k_wc, k_bc = jax.random.split(key, 5)

    x = jax.random.normal(k_x, (B, C, H, W), dtype=jnp.float32)
    w_base = jax.random.normal(k_wb, (C, hidden), dtype=jnp.float32) * 0.1
    b_base = jax.random.normal(k_bb, (hidden,), dtype=jnp.float32) * 0.1
    w_clf = jax.random.normal(k_wc, (hidden, num_classes), dtype=jnp.float32) * 0.1
    b_clf = jax.random.normal(k_bc, (num_classes,), dtype=jnp.float32) * 0.1

    # Pure-JAX reference of the same forward pass.
    pooled_ref = jnp.mean(x.reshape(B, C, H * W), axis=-1)
    feat_ref = jnp.maximum(pooled_ref @ w_base + b_base, 0.0)
    logits_ref = feat_ref @ w_clf + b_clf

    # Default tiling (single spatial chunk at this toy H*W=256).
    logits = jax.block_until_ready(
        multilabel_classifier_forward(x, w_base, b_base, w_clf, b_clf))
    assert logits.shape == (B, num_classes)
    assert jnp.allclose(logits, logits_ref, atol=1e-5), "mismatch vs reference"

    # spatial_tile=128 forces 2 spatial chunks so the streamed-accumulator path is
    # exercised too (real shapes auto-pick large, VMEM-budgeted chunks).
    logits2 = jax.block_until_ready(
        multilabel_classifier_forward(x, w_base, b_base, w_clf, b_clf,
                                      spatial_tile=128))
    assert jnp.allclose(logits2, logits_ref, atol=1e-5), "mismatch vs reference"

    # TODO(synk): training-mode Dropout (random mask + 1/(1-p) scaling) not implemented;
    # inference-mode (identity) semantics are reproduced exactly.
    print("KERNEL_OK")
</pallas_src>

<mosaic_0001>
module attributes {stable_mosaic.version = 11 : i64} {
  func.func @_classifier_kernel(%arg0: i32, %arg1: i32, %arg2: memref<2x4x256xf32, #tpu.memory_space<vmem>>, %arg3: memref<4x128xf32, #tpu.memory_space<vmem>>, %arg4: memref<1x128xf32, #tpu.memory_space<vmem>>, %arg5: memref<128x128xf32, #tpu.memory_space<vmem>>, %arg6: memref<1x128xf32, #tpu.memory_space<vmem>>, %arg7: memref<2x128xf32, #tpu.memory_space<vmem>>, %arg8: memref<2x4xf32, #tpu.memory_space<vmem>>) attributes {dimension_semantics = [#tpu.dimension_semantics<parallel>, #tpu.dimension_semantics<arbitrary>], iteration_bounds = array<i64: 1, 1>, scalar_prefetch = 0 : i64, scratch_operands = 1 : i64, tpu.core_type = #tpu.core_type<tc>, window_params = [{transform_indices = @transform_0, window_bounds = array<i64: 2, 4, 256>}, {pipeline_mode = #tpu.pipeline_mode<synchronous>, transform_indices = @transform_1, window_bounds = array<i64: 4, 128>}, {pipeline_mode = #tpu.pipeline_mode<synchronous>, transform_indices = @transform_2, window_bounds = array<i64: 1, 128>}, {pipeline_mode = #tpu.pipeline_mode<synchronous>, transform_indices = @transform_3, window_bounds = array<i64: 128, 128>}, {pipeline_mode = #tpu.pipeline_mode<synchronous>, transform_indices = @transform_4, window_bounds = array<i64: 1, 128>}, {transform_indices = @transform_5, window_bounds = array<i64: 2, 128>}]} {
    %c0_i32 = arith.constant 0 : i32
    %0 = arith.cmpi eq, %arg1, %c0_i32 : i32
    %1 = arith.extui %0 : i1 to i32
    %c0_i32_0 = arith.constant 0 : i32
    %2 = arith.cmpi ne, %1, %c0_i32_0 : i32
    scf.if %2 {
      %cst_9 = arith.constant 0.000000e+00 : f32
      %11 = vector.broadcast %cst_9 : f32 to vector<2x4xf32>
      %c0_10 = arith.constant 0 : index
      %c0_11 = arith.constant 0 : index
      %12 = vector.load %arg8[%c0_10, %c0_11] : memref<2x4xf32, #tpu.memory_space<vmem>>, vector<2x4xf32>
      tpu.vector_store %arg8[%c0_10, %c0_11], %11 {strides = array<i32>} : memref<2x4xf32, #tpu.memory_space<vmem>>, vector<2x4xf32>,
    } else {
    }
    %c0 = arith.constant 0 : index
    %c0_1 = arith.constant 0 : index
    %3 = vector.load %arg8[%c0, %c0_1] : memref<2x4xf32, #tpu.memory_space<vmem>>, vector<2x4xf32>
    %c0_2 = arith.constant 0 : index
    %c0_3 = arith.constant 0 : index
    %c0_4 = arith.constant 0 : index
    %4 = vector.load %arg2[%c0_2, %c0_3, %c0_4] : memref<2x4x256xf32, #tpu.memory_space<vmem>>, vector<2x4x256xf32>
    %cst = arith.constant dense<0.000000e+00> : vector<2x4xf32>
    %5 = vector.multi_reduction <add>, %4, %cst [2] : vector<2x4x256xf32> to vector<2x4xf32>
    %6 = arith.addf %3, %5 : vector<2x4xf32>
    %c0_5 = arith.constant 0 : index
    %c0_6 = arith.constant 0 : index
    %7 = vector.load %arg8[%c0_5, %c0_6] : memref<2x4xf32, #tpu.memory_space<vmem>>, vector<2x4xf32>
    tpu.vector_store %arg8[%c0_5, %c0_6], %6 {strides = array<i32>} : memref<2x4xf32, #tpu.memory_space<vmem>>, vector<2x4xf32>,
    %c0_i32_7 = arith.constant 0 : i32
    %8 = arith.cmpi eq, %arg1, %c0_i32_7 : i32
    %9 = arith.extui %8 : i1 to i32
    %c0_i32_8 = arith.constant 0 : i32
    %10 = arith.cmpi ne, %9, %c0_i32_8 : i32
    scf.if %10 {
      %c0_9 = arith.constant 0 : index
      %c0_10 = arith.constant 0 : index
      %11 = vector.load %arg8[%c0_9, %c0_10] : memref<2x4xf32, #tpu.memory_space<vmem>>, vector<2x4xf32>
      %c0_11 = arith.constant 0 : index
      %c0_12 = arith.constant 0 : index
      %12 = vector.load %arg3[%c0_11, %c0_12] : memref<4x128xf32, #tpu.memory_space<vmem>>, vector<4x128xf32>
      %cst_13 = arith.constant dense<0.000000e+00> : vector<2x128xf32>
      %13 = tpu.matmul %11, %12, %cst_13 {dimension_numbers = #tpu.dot_dimension_numbers<[1], [0], [0], [1], [0, 0, 1, 1], [], []>} : vector<2x4xf32>, vector<4x128xf32>, vector<2x128xf32> -> vector<2x128xf32>
      %c0_14 = arith.constant 0 : index
      %c0_15 = arith.constant 0 : index
      %14 = vector.load %arg4[%c0_14, %c0_15] : memref<1x128xf32, #tpu.memory_space<vmem>>, vector<1x128xf32>
      %15 = vector.broadcast %14 : vector<1x128xf32> to vector<2x128xf32>
      %16 = arith.addf %13, %15 : vector<2x128xf32>
      %cst_16 = arith.constant 0.000000e+00 : f32
      %17 = vector.broadcast %cst_16 : f32 to vector<2x128xf32>
      %18 = arith.maximumf %16, %17 : vector<2x128xf32>
      %c0_17 = arith.constant 0 : index
      %c0_18 = arith.constant 0 : index
      %19 = vector.load %arg5[%c0_17, %c0_18] : memref<128x128xf32, #tpu.memory_space<vmem>>, vector<128x128xf32>
      %cst_19 = arith.constant dense<0.000000e+00> : vector<2x128xf32>
      %20 = tpu.matmul %18, %19, %cst_19 {dimension_numbers = #tpu.dot_dimension_numbers<[1], [0], [0], [1], [0, 0, 1, 1], [], []>} : vector<2x128xf32>, vector<128x128xf32>, vector<2x128xf32> -> vector<2x128xf32>
      %c0_20 = arith.constant 0 : index
      %c0_21 = arith.constant 0 : index
      %21 = vector.load %arg6[%c0_20, %c0_21] : memref<1x128xf32, #tpu.memory_space<vmem>>, vector<1x128xf32>
      %22 = vector.broadcast %21 : vector<1x128xf32> to vector<2x128xf32>
      %23 = arith.addf %20, %22 : vector<2x128xf32>
      %c0_22 = arith.constant 0 : index
      %c0_23 = arith.constant 0 : index
      %24 = vector.load %arg7[%c0_22, %c0_23] : memref<2x128xf32, #tpu.memory_space<vmem>>, vector<2x128xf32>
      tpu.vector_store %arg7[%c0_22, %c0_23], %23 {strides = array<i32>} : memref<2x128xf32, #tpu.memory_space<vmem>>, vector<2x128xf32>,
    } else {
    }
    return
  }
  func.func @transform_0(%arg0: i32, %arg1: i32) -> (i32, i32, i32) {
    %c0_i32 = arith.constant 0 : i32
    %c0_i32_0 = arith.constant 0 : i32
    return %arg0, %c0_i32, %arg1 : i32, i32, i32
  }
  func.func @transform_1(%arg0: i32, %arg1: i32) -> (i32, i32) {
    %c0_i32 = arith.constant 0 : i32
    %c0_i32_0 = arith.constant 0 : i32
    %c0_i32_1 = arith.constant 0 : i32
    return %c0_i32, %c0_i32_0 : i32, i32
  }
  func.func @transform_2(%arg0: i32, %arg1: i32) -> (i32, i32) {
    %c0_i32 = arith.constant 0 : i32
    %c0_i32_0 = arith.constant 0 : i32
    %c0_i32_1 = arith.constant 0 : i32
    return %c0_i32, %c0_i32_0 : i32, i32
  }
  func.func @transform_3(%arg0: i32, %arg1: i32) -> (i32, i32) {
    %c0_i32 = arith.constant 0 : i32
    %c0_i32_0 = arith.constant 0 : i32
    %c0_i32_1 = arith.constant 0 : i32
    return %c0_i32, %c0_i32_0 : i32, i32
  }
  func.func @transform_4(%arg0: i32, %arg1: i32) -> (i32, i32) {
    %c0_i32 = arith.constant 0 : i32
    %c0_i32_0 = arith.constant 0 : i32
    %c0_i32_1 = arith.constant 0 : i32
    return %c0_i32, %c0_i32_0 : i32, i32
  }
  func.func @transform_5(%arg0: i32, %arg1: i32) -> (i32, i32) {
    %c0_i32 = arith.constant 0 : i32
    %c0_i32_0 = arith.constant 0 : i32
    return %arg0, %c0_i32 : i32, i32
  }
}

</mosaic_0001>

<llo_original>
// kernel: tpu_custom_call.1
$region0: #{tpu_custom_call.1}
  #allocation0 [shape = 'u32[]', space=smem, size = 0x4, offset = 0x4, fixed_abs, tag = 'smem constant byte address 0x4 - core index']
  #allocation1 [shape = 'u32[144,128]{1,0:T(1,128)}', space=vmem, size = 0x12000, scoped, tag = 'internal scratch']
  #allocation2 [shape = 'f32[2,4]{1,0:T(2,128)}', space=vmem, size = 0x400, scoped, tag = 'scratch operand']
  %s0 = inlined_call_operand.hbm [shape: f32[2,4,256], index: 0, kind: input, shape index: {}]
  %s1 = inlined_call_operand.hbm [shape: f32[4,128], index: 1, kind: input, shape index: {}]
  %s2 = inlined_call_operand.vmem [shape: f32[1,128], index: 2, kind: input, shape index: {}]
  %s3 = inlined_call_operand.hbm [shape: f32[128,128], index: 3, kind: input, shape index: {}]
  %s4 = inlined_call_operand.vmem [shape: f32[1,128], index: 4, kind: input, shape index: {}]
  %s5 = inlined_call_operand.hbm [shape: f32[2,128], index: 5, kind: output, shape index: {}]
  %s6 = sld [smem:[#allocation0]]
  $region50: #{tpu_custom_call.1} parent=0
    _
  %s8 = ssub.s32 1, %s6
  %s9 = scalar_select 0, %s8, %s6
  $region1: #{tpu_custom_call.1} parent=0
    #allocation3 [shape = 'u8[8192]{0}', space=vmem, size = 0x2000, scoped, tag = 'input window, operand 0, single buffered']
    #allocation4 [shape = 's32[1]{0}', space=sflag, size = 0x4, scoped, tag = 'scoped memory for tpu_custom_call.1']
    #allocation5 [shape = 's32[1]{0}', space=sflag, size = 0x4, scoped, tag = 'scoped memory for tpu_custom_call.1']
    #allocation6 [shape = 'u8[2048]{0}', space=vmem, size = 0x800, scoped, tag = 'input window, operand 1, single buffered']
    #allocation7 [shape = 's32[1]{0}', space=sflag, size = 0x4, scoped, tag = 'scoped memory for tpu_custom_call.1']
    #allocation8 [shape = 'u8[65536]{0}', space=vmem, size = 0x10000, scoped, tag = 'input window, operand 3, single buffered']
    #allocation9 [shape = 'u8[1024]{0}', space=vmem, size = 0x400, scoped, tag = 'output window, operand 0, single buffered']
    %10 = vsyncpa [#allocation4], 0
    %11 = vsyncpa [#allocation7], 0
    %12 = vsyncpa [#allocation5], 0
    // Predicated region
    $region2: #{tpu_custom_call.1} parent=1 // pred_check
      _
    $region3: #{tpu_custom_call.1} parent=1 // pred_check_branch
      %14 = sbr.rel (0) target = $region5
    $region4: #{tpu_custom_call.1} parent=1 // pred_region
      %s16 = ssub.s32 256, 256
      %17 = vsyncadd [#allocation4], %s16
      %s18 = sshll.u32 [#allocation3], 4
      %s19 = int_to_ptr.vmem [resolvable:$true] %s18
      %24 = dma.hbm_to_vmem [thread:$0]  %s0, 256, %s19, [#allocation4], 128, 128, 8
    $region5: #{tpu_custom_call.1} parent=1 // pred_fallthru
      _
    // Predicated region
    $region6: #{tpu_custom_call.1} parent=1 // pred_check
      _
    $region7: #{tpu_custom_call.1} parent=1 // pred_check_branch
      %26 = sbr.rel (0) target = $region9
    $region8: #{tpu_custom_call.1} parent=1 // pred_region
      %s28 = ssub.s32 64, 64
      %29 = vsyncadd [#allocation7], %s28
      %s31 = sshll.u32 [#allocation6], 4
      %s32 = int_to_ptr.vmem [resolvable:$true] %s31
      %34 = dma.hbm_to_vmem [thread:$0]  %s1, 64, %s32, [#allocation7]
    $region9: #{tpu_custom_call.1} parent=1 // pred_fallthru
      _
    // Predicated region
    $region10: #{tpu_custom_call.1} parent=1 // pred_check
      _
    $region11: #{tpu_custom_call.1} parent=1 // pred_check_branch
      %36 = sbr.rel (0) target = $region13
    $region12: #{tpu_custom_call.1} parent=1 // pred_region
      _
    $region13: #{tpu_custom_call.1} parent=1 // pred_fallthru
      _
    // Predicated region
    $region14: #{tpu_custom_call.1} parent=1 // pred_check
      _
    $region15: #{tpu_custom_call.1} parent=1 // pred_check_branch
      %38 = sbr.rel (0) target = $region17
    $region16: #{tpu_custom_call.1} parent=1 // pred_region
      %s40 = ssub.s32 2048, 2048
      %41 = vsyncadd [#allocation7], %s40
      %s42 = sshll.u32 [#allocation8], 4
      %s43 = int_to_ptr.vmem [resolvable:$true] %s42
      %48 = dma.hbm_to_vmem [thread:$0]  %s3, 2048, %s43, [#allocation7], 128, 128, 8
    $region17: #{tpu_custom_call.1} parent=1 // pred_fallthru
      _
    // Predicated region
    $region18: #{tpu_custom_call.1} parent=1 // pred_check
      _
    $region19: #{tpu_custom_call.1} parent=1 // pred_check_branch
      %50 = sbr.rel (0) target = $region21
    $region20: #{tpu_custom_call.1} parent=1 // pred_region
      _
    $region21: #{tpu_custom_call.1} parent=1 // pred_fallthru
      _
    // Predicated region
    $region22: #{tpu_custom_call.1} parent=1 // pred_check
      _
    $region23: #{tpu_custom_call.1} parent=1 // pred_check_branch
      %52 = sbr.rel (0) target = $region25
    $region24: #{tpu_custom_call.1} parent=1 // pred_region
      %53 = dma.done [#allocation4], 256
    $region25: #{tpu_custom_call.1} parent=1 // pred_fallthru
      _
    // Predicated region
    $region26: #{tpu_custom_call.1} parent=1 // pred_check
      _
    $region27: #{tpu_custom_call.1} parent=1 // pred_check_branch
      %55 = sbr.rel (0) target = $region29
    $region28: #{tpu_custom_call.1} parent=1 // pred_region
      %56 = dma.done [#allocation7], 64
    $region29: #{tpu_custom_call.1} parent=1 // pred_fallthru
      _
    // Predicated region
    $region30: #{tpu_custom_call.1} parent=1 // pred_check
      _
    $region31: #{tpu_custom_call.1} parent=1 // pred_check_branch
      %58 = sbr.rel (0) target = $region33
    $region32: #{tpu_custom_call.1} parent=1 // pred_region
      %59 = dma.done [#allocation7], 2048
    $region33: #{tpu_custom_call.1} parent=1 // pred_fallthru
      _
    %p60 = scmp.eq.s32.totalorder 0, 0
    // Predicated region
    $region34: #{tpu_custom_call.1} parent=1 // pred_check
      %p61 = pneg %p60
    $region35: #{tpu_custom_call.1} parent=1 // pred_check_branch
      %63 = sbr.rel (%p61) target = $region37
    $region36: #{tpu_custom_call.1} parent=1 // pred_region
      %vm64 = vcmask 25600
      %65 = vst.msk [vmem:[#allocation2] sm:$0x3] %vm64, 0.0
    $region37: #{tpu_custom_call.1} parent=1 // pred_fallthru
      _
    %v66 = vld [vmem:[#allocation2] sm:$0x3]
    %v67 = vld [vmem:[#allocation3] sm:$0xff]
    %v68 = vld [vmem:[#allocation3 + $0x8] sm:$0xff]
    %v71 = vcombine.high %v67, %v67
    %v72 = vcombine.high %v68, %v68
    %vm75 = vcmask 1043456
    %v76 = vsel %vm75, %v67, 0.0
    %v77 = vsel %vm75, %v71, 0.0
    %v78 = vadd.f32 %v76, %v77
    %79 = vadd.xlane.f32.xlu0 %v78
    %v80 = vpop.xlane.xlu0 %79
    %v81 = vsel %vm75, %v68, 0.0
    %v82 = vsel %vm75, %v72, 0.0
    %v83 = vadd.f32 %v81, %v82
    %84 = vadd.xlane.f32.xlu0 %v83
    %v85 = vpop.xlane.xlu0 %84
    %v88 = vlaneseq
    %v89 = vand.u32 %v88, 127
    %v90 = vlaneseq
    %v91 = vshrl.u32 %v90, 7
    %v92 = vsub.s32 %v89, %v91
    %v93 = vrot.slane %v80, %v92
    %v94 = vlaneseq
    %v95 = vshrl.u32 %v94, 7
    %v96 = vsub.s32 %v89, %v95
    %v97 = vrot.slane %v85, %v96
    %vm98 = vcmask 1041409
    %v99 = vsel %vm98, %v97, %v93
    %v101 = vadd.f32 %v66, %v99
    %vm102 = vcmask 25600
    %103 = vst.msk [vmem:[#allocation2] sm:$0x3] %vm102, %v101
    // Predicated region
    $region38: #{tpu_custom_call.1} parent=1 // pred_check
      %p104 = pneg %p60
    $region39: #{tpu_custom_call.1} parent=1 // pred_check_branch
      %106 = sbr.rel (%p104) target = $region41
    $region40: #{tpu_custom_call.1} parent=1 // pred_region
      %v107 = vld [vmem:[#allocation2] sm:$0x3]
      %v108 = vld [vmem:[#allocation6] sm:$0xf]
      %v109 = vld [vmem:[%s2] sm:$0x1]
      %v111 = vlaneseq
      %v112 = vshrl.u32 %v111, 7
      %v113 = vsub.s32 0, %v112
      %v114 = vrot.slane %v109, %v113
      %vm116 = vcmask 31744
      %v118 = vsel %vm116, %v107, 0
      %v121 = vsel %vm75, %v108, 0
      %123 = vmatprep.subr.mxu0 0.0
      %124 = vmatpush1.msra.mxu0 %v121
      %125 = vmatprep.subr.mxu0 0.0
      %126 = vmatpush1.msra.mxu0 0.0
      %127 = vmatprep.subr.mxu0 0.0
      %128 = vmatpush1.msra.mxu0 0.0
      %129 = vmatprep.subr.mxu0 0.0
      %130 = vmatpush1.msra.mxu0 0.0
      %131 = vmatprep.subr.mxu0 0.0
      %132 = vmatpush1.msra.mxu0 0.0
      %133 = vmatprep.subr.mxu0 0.0
      %134 = vmatpush1.msra.mxu0 0.0
      %135 = vmatprep.subr.mxu0 0.0
      %136 = vmatpush1.msra.mxu0 0.0
      %137 = vmatprep.subr.mxu0 0.0
      %138 = vmatpush1.msra.mxu0 0.0
      %139 = vmatprep.subr.mxu0 0.0
      %140 = vmatpush1.msra.mxu0 0.0
      %141 = vmatprep.subr.mxu0 0.0
      %142 = vmatpush1.msra.mxu0 0.0
      %143 = vmatprep.subr.mxu0 0.0
      %144 = vmatpush1.msra.mxu0 0.0
      %145 = vmatprep.subr.mxu0 0.0
      %146 = vmatpush1.msra.mxu0 0.0
      %147 = vmatprep.subr.mxu0 0.0
      %148 = vmatpush1.msra.mxu0 0.0
      %149 = vmatprep.subr.mxu0 0.0
      %150 = vmatpush1.msra.mxu0 0.0
      %151 = vmatprep.subr.mxu0 0.0
      %152 = vmatpush1.msra.mxu0 0.0
      %153 = vmatprep.subr.mxu0 0.0
      %154 = vmatpush1.msra.mxu0 0.0
      %155 = vmatprep.subr.mxu0 0.0
      %156 = vmatpush1.msra.mxu0 0.0
      %157 = vmatprep.subr.mxu0 0.0
      %158 = vmatpush1.msra.mxu0 0.0
      %159 = vmatprep.subr.mxu0 0.0
      %160 = vmatpush1.msra.mxu0 0.0
      %161 = vmatprep.subr.mxu0 0.0
      %162 = vmatpush1.msra.mxu0 0.0
      %163 = vmatprep.subr.mxu0 0.0
      %164 = vmatpush1.msra.mxu0 0.0
      %165 = vmatprep.subr.mxu0 0.0
      %166 = vmatpush1.msra.mxu0 0.0
      %167 = vmatprep.subr.mxu0 0.0
      %168 = vmatpush1.msra.mxu0 0.0
      %169 = vmatprep.subr.mxu0 0.0
      %170 = vmatpush1.msra.mxu0 0.0
      %171 = vmatprep.subr.mxu0 0.0
      %172 = vmatpush1.msra.mxu0 0.0
      %173 = vmatprep.subr.mxu0 0.0
      %174 = vmatpush1.msra.mxu0 0.0
      %175 = vmatprep.subr.mxu0 0.0
      %176 = vmatpush1.msra.mxu0 0.0
      %177 = vmatprep.subr.mxu0 0.0
      %178 = vmatpush1.msra.mxu0 0.0
      %179 = vmatprep.subr.mxu0 0.0
      %180 = vmatpush1.msra.mxu0 0.0
      %181 = vmatprep.subr.mxu0 0.0
      %182 = vmatpush1.msra.mxu0 0.0
      %183 = vmatprep.subr.mxu0 0.0
      %184 = vmatpush1.msra.mxu0 0.0
      %185 = vmatprep.subr.mxu0 0.0
      %186 = vmatpush1.msra.mxu0 0.0
      %187 = vmatprep.mubr.f32.mxu0 0.0
      %188 = vmatmul.mubr.f32.gmra.mrb[0].mxu0 %v118
      %v189 = vpop.f32.mrb[0].mxu0
      %v190 = vadd.f32 %v114, %v189
      %v191 = vpop.f32.mrb[0].mxu0
      %192 = vdwg.mxu0
      %v193 = vmax.f32 %v190, 0.0
      %v194 = vld [vmem:[#allocation8] sm:$0xff]
      %v195 = vld [vmem:[#allocation8 + $0x8] sm:$0xff]
      %v196 = vld [vmem:[#allocation8 + $0x10] sm:$0xff]
      %v197 = vld [vmem:[#allocation8 + $0x18] sm:$0xff]
      %v198 = vld [vmem:[#allocation8 + $0x20] sm:$0xff]
      %v199 = vld [vmem:[#allocation8 + $0x28] sm:$0xff]
      %v200 = vld [vmem:[#allocation8 + $0x30] sm:$0xff]
      %v201 = vld [vmem:[#allocation8 + $0x38] sm:$0xff]
      %v202 = vld [vmem:[#allocation8 + $0x40] sm:$0xff]
      %v203 = vld [vmem:[#allocation8 + $0x48] sm:$0xff]
      %v204 = vld [vmem:[#allocation8 + $0x50] sm:$0xff]
      %v205 = vld [vmem:[#allocation8 + $0x58] sm:$0xff]
      %v206 = vld [vmem:[#allocation8 + $0x60] sm:$0xff]
      %v207 = vld [vmem:[#allocation8 + $0x68] sm:$0xff]
      %v208 = vld [vmem:[#allocation8 + $0x70] sm:$0xff]
      %v209 = vld [vmem:[#allocation8 + $0x78] sm:$0xff]
      %v210 = vld [vmem:[%s4] sm:$0x1]
      %v212 = vlaneseq
      %v213 = vshrl.u32 %v212, 7
      %v214 = vsub.s32 0, %v213
      %v215 = vrot.slane %v210, %v214
      %217 = vmatprep.subr.mxu0 0.0
      %218 = vmatpush1.msra.mxu0 %v194
      %219 = vmatprep.subr.mxu0 0.0
      %220 = vmatpush1.msra.mxu0 %v195
      %221 = vmatprep.subr.mxu0 0.0
      %222 = vmatpush1.msra.mxu0 %v196
      %223 = vmatprep.subr.mxu0 0.0
      %224 = vmatpush1.msra.mxu0 %v197
      %225 = vmatprep.subr.mxu0 0.0
      %226 = vmatpush1.msra.mxu0 %v198
      %227 = vmatprep.subr.mxu0 0.0
      %228 = vmatpush1.msra.mxu0 %v199
      %229 = vmatprep.subr.mxu0 0.0
      %230 = vmatpush1.msra.mxu0 %v200
      %231 = vmatprep.subr.mxu0 0.0
      %232 = vmatpush1.msra.mxu0 %v201
      %233 = vmatprep.subr.mxu0 0.0
      %234 = vmatpush1.msra.mxu0 %v202
      %235 = vmatprep.subr.mxu0 0.0
      %236 = vmatpush1.msra.mxu0 %v203
      %237 = vmatprep.subr.mxu0 0.0
      %238 = vmatpush1.msra.mxu0 %v204
      %239 = vmatprep.subr.mxu0 0.0
      %240 = vmatpush1.msra.mxu0 %v205
      %241 = vmatprep.subr.mxu0 0.0
      %242 = vmatpush1.msra.mxu0 %v206
      %243 = vmatprep.subr.mxu0 0.0
      %244 = vmatpush1.msra.mxu0 %v207
      %245 = vmatprep.subr.mxu0 0.0
      %246 = vmatpush1.msra.mxu0 %v208
      %247 = vmatprep.subr.mxu0 0.0
      %248 = vmatpush1.msra.mxu0 %v209
      %249 = vmatprep.subr.mxu0 0.0
      %250 = vmatpush1.msra.mxu0 0.0
      %251 = vmatprep.subr.mxu0 0.0
      %252 = vmatpush1.msra.mxu0 0.0
      %253 = vmatprep.subr.mxu0 0.0
      %254 = vmatpush1.msra.mxu0 0.0
      %255 = vmatprep.subr.mxu0 0.0
      %256 = vmatpush1.msra.mxu0 0.0
      %257 = vmatprep.subr.mxu0 0.0
      %258 = vmatpush1.msra.mxu0 0.0
      %259 = vmatprep.subr.mxu0 0.0
      %260 = vmatpush1.msra.mxu0 0.0
      %261 = vmatprep.subr.mxu0 0.0
      %262 = vmatpush1.msra.mxu0 0.0
      %263 = vmatprep.subr.mxu0 0.0
      %264 = vmatpush1.msra.mxu0 0.0
      %265 = vmatprep.subr.mxu0 0.0
      %266 = vmatpush1.msra.mxu0 0.0
      %267 = vmatprep.subr.mxu0 0.0
      %268 = vmatpush1.msra.mxu0 0.0
      %269 = vmatprep.subr.mxu0 0.0
      %270 = vmatpush1.msra.mxu0 0.0
      %271 = vmatprep.subr.mxu0 0.0
      %272 = vmatpush1.msra.mxu0 0.0
      %273 = vmatprep.subr.mxu0 0.0
      %274 = vmatpush1.msra.mxu0 0.0
      %275 = vmatprep.subr.mxu0 0.0
      %276 = vmatpush1.msra.mxu0 0.0
      %277 = vmatprep.subr.mxu0 0.0
      %278 = vmatpush1.msra.mxu0 0.0
      %279 = vmatprep.subr.mxu0 0.0
      %280 = vmatpush1.msra.mxu0 0.0
      %281 = vmatprep.mubr.f32.mxu0 0.0
      %282 = vmatmul.mubr.f32.gmra.mrb[0].mxu0 %v193
      %v283 = vpop.f32.mrb[0].mxu0
      %v284 = vadd.f32 %v215, %v283
      %v285 = vpop.f32.mrb[0].mxu0
      %286 = vdwg.mxu0
      %287 = vst [vmem:[#allocation9] sm:$0x3] %v284
    $region41: #{tpu_custom_call.1} parent=1 // pred_fallthru
      _
    // Predicated region
    $region42: #{tpu_custom_call.1} parent=1 // pred_check
      _
    $region43: #{tpu_custom_call.1} parent=1 // pred_check_branch
      %289 = sbr.rel (0) target = $region45
    $region44: #{tpu_custom_call.1} parent=1 // pred_region
      %s291 = ssub.s32 32, 32
      %292 = vsyncadd [#allocation5], %s291
      %s294 = sshll.u32 [#allocation9], 4
      %s295 = int_to_ptr.vmem [resolvable:$true] %s294
      %297 = dma.vmem_to_hbm [thread:$0]  %s295, 32, %s5, [#allocation5]
    $region45: #{tpu_custom_call.1} parent=1 // pred_fallthru
      _
    // Predicated region
    $region46: #{tpu_custom_call.1} parent=1 // pred_check
      _
    $region47: #{tpu_custom_call.1} parent=1 // pred_check_branch
      %299 = sbr.rel (0) target = $region49
    $region48: #{tpu_custom_call.1} parent=1 // pred_region
      %300 = dma.done [#allocation5], 32
    $region49: #{tpu_custom_call.1} parent=1 // pred_fallthru
      _
    %301 = vsyncpa [#allocation4], 1
    %302 = vsyncpa [#allocation7], 1
    %303 = vsyncpa [#allocation5], 1

</llo_original>
